<compile_context>
chip_gen: v7x
topology: tpu7x:2x2x1
jax: 0.10.0
libtpu: 0.0.40
codegen_flags: <defaults>
</compile_context>

<pallas_src>
import functools

import jax
import jax.numpy as jnp
from jax.experimental import pallas as pl
from jax.experimental.pallas import tpu as pltpu


def _patch_embed_kernel(x_ref, w_ref, o_ref):
    # x_ref: (1, C, TNG, G*P)  packed patch rows of one batch, all channels
    # w_ref: (C, G*P, G*E)     per-channel block-diagonal packed projection (resident)
    # o_ref: (1, TNG, G*E)     packed output rows (lane-dense when G*E % 128 == 0)
    C = w_ref.shape[0]
    acc = jnp.dot(x_ref[0, 0], w_ref[0], preferred_element_type=jnp.float32)
    for c in range(1, C):  # C is tiny -> clean unrolled chain of MXU matmuls
        acc = acc + jnp.dot(x_ref[0, c], w_ref[c], preferred_element_type=jnp.float32)
    o_ref[0] = acc.astype(o_ref.dtype)


def _patch_embed_ref(x, weight, patch_size):
    # Plain-XLA fallback / reference: exact same math.
    B, C, L = x.shape
    N = L // patch_size
    return jnp.einsum(
        "bcnp,ecp->bne",
        x.reshape(B, C, N, patch_size),
        weight,
        precision=jax.lax.Precision.HIGHEST,
    )


def patch_embed(x, weight, patch_size, *, block_rows=2048, force_pallas=False):
    """x: (B, C, L) float32 (NCL, as PyTorch Conv1d expects).
    weight: (E, C, P) Conv1d weight (no bias).
    Returns (B, L // P, E) — same as nn.Conv1d(stride=P) + Rearrange('b c l -> b l c')."""
    B, C, L = x.shape
    E, Cw, P = weight.shape
    assert Cw == C and P == patch_size and L % P == 0
    N = L // P

    # Small-problem fallback: pallas_call launch + grid-step overhead would dominate.
    if not force_pallas and B * N < 1024:
        return _patch_embed_ref(x, weight, patch_size)

    # --- choose pack factor G: smallest G with N % G == 0 and (G*E) % 128 == 0 -------
    G = 1
    for cand in (1, 2, 4, 8):
        if N % cand == 0 and (cand * E) % 128 == 0:
            G = cand
            break
    NG = N // G          # packed rows per batch
    GP = G * P           # packed contraction width per channel
    GE = G * E           # packed (lane-dense) output width

    # --- build the tiny block-diagonal packed weight: (C, G*P, G*E) ------------------
    # w_bd[c, g1*P + p, g2*E + e] = weight[e, c, p] if g1 == g2 else 0
    wc = jnp.transpose(weight, (1, 2, 0))                      # (C, P, E)
    eye_g = jnp.eye(G, dtype=weight.dtype)                     # (G, G)
    w_bd = (eye_g[None, :, None, :, None] * wc[:, None, :, None, :]).reshape(C, GP, GE)

    # --- free, contiguous reshapes of x / out (no transposes, no extra HBM traffic) --
    x_packed = x.reshape(B, C, NG, GP)

    # --- tile the packed-row axis ------------------------------------------------------
    tng = min(block_rows, NG)
    if tng < NG and tng % 8 != 0:          # block dims must be 8-aligned unless full
        tng = max(8, (tng // 8) * 8)
    n_tiles = pl.cdiv(NG, tng)             # last tile may be partial (writes masked)

    out_packed = pl.pallas_call(
        _patch_embed_kernel,
        out_shape=jax.ShapeDtypeStruct((B, NG, GE), x.dtype),
        grid=(B, n_tiles),
        in_specs=[
            # x tile: one batch, all channels, tng packed rows (contiguous per channel)
            pl.BlockSpec((1, C, tng, GP), lambda b, i: (b, 0, i, 0)),
            # packed weight: constant block index -> fetched once, resident in VMEM
            pl.BlockSpec((C, GP, GE), lambda b, i: (0, 0, 0)),
        ],
        out_specs=pl.BlockSpec((1, tng, GE), lambda b, i: (b, i, 0)),
        compiler_params=pltpu.CompilerParams(
            dimension_semantics=("parallel", "parallel"),
            vmem_limit_bytes=32 * 1024 * 1024,
        ),
    )(x_packed, w_bd)

    return out_packed.reshape(B, N, E)


if __name__ == "__main__":
    patch_size = 4
    in_chans = 4
    embed_dim = 32

    key = jax.random.PRNGKey(0)
    kx, kw, kx2 = jax.random.split(key, 3)

    # --- small demo (matches the module's implied shapes): B=2, C=4, L=16 -------------
    x = jax.random.normal(kx, (2, in_chans, 16), dtype=jnp.float32)
    weight = jax.random.normal(kw, (embed_dim, in_chans, patch_size), dtype=jnp.float32) * 0.02

    f_small = jax.jit(functools.partial(patch_embed, patch_size=patch_size, force_pallas=True))
    out = jax.block_until_ready(f_small(x, weight))

    ref = jax.lax.conv_general_dilated(
        x, weight,
        window_strides=(patch_size,),
        padding="VALID",
        dimension_numbers=("NCH", "OIH", "NCH"),
    ).transpose(0, 2, 1)  # (B, N, E)

    assert out.shape == (2, 16 // patch_size, embed_dim)
    assert jnp.allclose(out, ref, atol=1e-4, rtol=1e-4)

    # --- larger check: exercises multi-tile grid + masked partial last tile -----------
    x_big = jax.random.normal(kx2, (2, in_chans, 40960), dtype=jnp.float32)
    f_big = jax.jit(functools.partial(patch_embed, patch_size=patch_size))
    out_big = jax.block_until_ready(f_big(x_big, weight))
    ref_big = _patch_embed_ref(x_big, weight, patch_size)
    assert out_big.shape == (2, 40960 // patch_size, embed_dim)
    assert jnp.allclose(out_big, ref_big, atol=1e-4, rtol=1e-4)

    print("KERNEL_OK")
</pallas_src>

<mosaic_0001>
module attributes {stable_mosaic.version = 11 : i64} {
  func.func @_patch_embed_kernel(%arg0: i32, %arg1: i32, %arg2: memref<1x4x1x16xf32, #tpu.memory_space<vmem>>, %arg3: memref<4x16x128xf32, #tpu.memory_space<vmem>>, %arg4: memref<1x1x128xf32, #tpu.memory_space<vmem>>) attributes {dimension_semantics = [#tpu.dimension_semantics<parallel>, #tpu.dimension_semantics<parallel>], iteration_bounds = array<i64: 2, 1>, scalar_prefetch = 0 : i64, scratch_operands = 0 : i64, tpu.core_type = #tpu.core_type<tc>, window_params = [{transform_indices = @transform_0, window_bounds = array<i64: 1, 4, 1, 16>}, {pipeline_mode = #tpu.pipeline_mode<synchronous>, transform_indices = @transform_1, window_bounds = array<i64: 4, 16, 128>}, {transform_indices = @transform_2, window_bounds = array<i64: 1, 1, 128>}]} {
    %c0 = arith.constant 0 : index
    %c0_0 = arith.constant 0 : index
    %c0_1 = arith.constant 0 : index
    %c0_2 = arith.constant 0 : index
    %0 = vector.load %arg2[%c0, %c0_0, %c0_1, %c0_2] : memref<1x4x1x16xf32, #tpu.memory_space<vmem>>, vector<1x1x1x16xf32>
    %1 = vector.shape_cast %0 : vector<1x1x1x16xf32> to vector<1x16xf32>
    %c0_3 = arith.constant 0 : index
    %c0_4 = arith.constant 0 : index
    %c0_5 = arith.constant 0 : index
    %2 = vector.load %arg3[%c0_3, %c0_4, %c0_5] : memref<4x16x128xf32, #tpu.memory_space<vmem>>, vector<1x16x128xf32>
    %3 = vector.shape_cast %2 : vector<1x16x128xf32> to vector<16x128xf32>
    %cst = arith.constant dense<0.000000e+00> : vector<1x128xf32>
    %4 = tpu.matmul %1, %3, %cst {dimension_numbers = #tpu.dot_dimension_numbers<[1], [0], [0], [1], [0, 0, 1, 1], [], []>} : vector<1x16xf32>, vector<16x128xf32>, vector<1x128xf32> -> vector<1x128xf32>
    %c0_6 = arith.constant 0 : index
    %c1 = arith.constant 1 : index
    %c0_7 = arith.constant 0 : index
    %c0_8 = arith.constant 0 : index
    %5 = vector.load %arg2[%c0_6, %c1, %c0_7, %c0_8] : memref<1x4x1x16xf32, #tpu.memory_space<vmem>>, vector<1x1x1x16xf32>
    %6 = vector.shape_cast %5 : vector<1x1x1x16xf32> to vector<1x16xf32>
    %c1_9 = arith.constant 1 : index
    %c0_10 = arith.constant 0 : index
    %c0_11 = arith.constant 0 : index
    %7 = vector.load %arg3[%c1_9, %c0_10, %c0_11] : memref<4x16x128xf32, #tpu.memory_space<vmem>>, vector<1x16x128xf32>
    %8 = vector.shape_cast %7 : vector<1x16x128xf32> to vector<16x128xf32>
    %cst_12 = arith.constant dense<0.000000e+00> : vector<1x128xf32>
    %9 = tpu.matmul %6, %8, %cst_12 {dimension_numbers = #tpu.dot_dimension_numbers<[1], [0], [0], [1], [0, 0, 1, 1], [], []>} : vector<1x16xf32>, vector<16x128xf32>, vector<1x128xf32> -> vector<1x128xf32>
    %10 = arith.addf %4, %9 : vector<1x128xf32>
    %c0_13 = arith.constant 0 : index
    %c2 = arith.constant 2 : index
    %c0_14 = arith.constant 0 : index
    %c0_15 = arith.constant 0 : index
    %11 = vector.load %arg2[%c0_13, %c2, %c0_14, %c0_15] : memref<1x4x1x16xf32, #tpu.memory_space<vmem>>, vector<1x1x1x16xf32>
    %12 = vector.shape_cast %11 : vector<1x1x1x16xf32> to vector<1x16xf32>
    %c2_16 = arith.constant 2 : index
    %c0_17 = arith.constant 0 : index
    %c0_18 = arith.constant 0 : index
    %13 = vector.load %arg3[%c2_16, %c0_17, %c0_18] : memref<4x16x128xf32, #tpu.memory_space<vmem>>, vector<1x16x128xf32>
    %14 = vector.shape_cast %13 : vector<1x16x128xf32> to vector<16x128xf32>
    %cst_19 = arith.constant dense<0.000000e+00> : vector<1x128xf32>
    %15 = tpu.matmul %12, %14, %cst_19 {dimension_numbers = #tpu.dot_dimension_numbers<[1], [0], [0], [1], [0, 0, 1, 1], [], []>} : vector<1x16xf32>, vector<16x128xf32>, vector<1x128xf32> -> vector<1x128xf32>
    %16 = arith.addf %10, %15 : vector<1x128xf32>
    %c0_20 = arith.constant 0 : index
    %c3 = arith.constant 3 : index
    %c0_21 = arith.constant 0 : index
    %c0_22 = arith.constant 0 : index
    %17 = vector.load %arg2[%c0_20, %c3, %c0_21, %c0_22] : memref<1x4x1x16xf32, #tpu.memory_space<vmem>>, vector<1x1x1x16xf32>
    %18 = vector.shape_cast %17 : vector<1x1x1x16xf32> to vector<1x16xf32>
    %c3_23 = arith.constant 3 : index
    %c0_24 = arith.constant 0 : index
    %c0_25 = arith.constant 0 : index
    %19 = vector.load %arg3[%c3_23, %c0_24, %c0_25] : memref<4x16x128xf32, #tpu.memory_space<vmem>>, vector<1x16x128xf32>
    %20 = vector.shape_cast %19 : vector<1x16x128xf32> to vector<16x128xf32>
    %cst_26 = arith.constant dense<0.000000e+00> : vector<1x128xf32>
    %21 = tpu.matmul %18, %20, %cst_26 {dimension_numbers = #tpu.dot_dimension_numbers<[1], [0], [0], [1], [0, 0, 1, 1], [], []>} : vector<1x16xf32>, vector<16x128xf32>, vector<1x128xf32> -> vector<1x128xf32>
    %22 = arith.addf %16, %21 : vector<1x128xf32>
    %c0_27 = arith.constant 0 : index
    %c0_28 = arith.constant 0 : index
    %c0_29 = arith.constant 0 : index
    %23 = vector.load %arg4[%c0_27, %c0_28, %c0_29] : memref<1x1x128xf32, #tpu.memory_space<vmem>>, vector<1x1x128xf32>
    %24 = vector.shape_cast %23 : vector<1x1x128xf32> to vector<1x128xf32>
    %25 = vector.shape_cast %22 : vector<1x128xf32> to vector<1x1x128xf32>
    tpu.vector_store %arg4[%c0_27, %c0_28, %c0_29], %25 {strides = array<i32>} : memref<1x1x128xf32, #tpu.memory_space<vmem>>, vector<1x1x128xf32>,
    return
  }
  func.func @transform_0(%arg0: i32, %arg1: i32) -> (i32, i32, i32, i32) {
    %c0_i32 = arith.constant 0 : i32
    %c0_i32_0 = arith.constant 0 : i32
    %c0_i32_1 = arith.constant 0 : i32
    return %arg0, %c0_i32, %arg1, %c0_i32_0 : i32, i32, i32, i32
  }
  func.func @transform_1(%arg0: i32, %arg1: i32) -> (i32, i32, i32) {
    %c0_i32 = arith.constant 0 : i32
    %c0_i32_0 = arith.constant 0 : i32
    %c0_i32_1 = arith.constant 0 : i32
    %c0_i32_2 = arith.constant 0 : i32
    return %c0_i32, %c0_i32_0, %c0_i32_1 : i32, i32, i32
  }
  func.func @transform_2(%arg0: i32, %arg1: i32) -> (i32, i32, i32) {
    %c0_i32 = arith.constant 0 : i32
    %c0_i32_0 = arith.constant 0 : i32
    return %arg0, %arg1, %c0_i32 : i32, i32, i32
  }
}

</mosaic_0001>

<llo_original>
// kernel: patch_embed.1
$region0: #{patch_embed.1}
  #allocation0 [shape = 'u32[]', space=smem, size = 0x4, offset = 0x4, fixed_abs, tag = 'smem constant byte address 0x4 - core index']
  #allocation1 [shape = 'u32[144,128]{1,0:T(1,128)}', space=vmem, size = 0x12000, scoped, tag = 'internal scratch']
  %s0 = inlined_call_operand.vmem [shape: f32[2,4,1,16], index: 0, kind: input, shape index: {}]
  %s1 = inlined_call_operand.vmem [shape: f32[4,16,128], index: 1, kind: input, shape index: {}]
  %s2 = inlined_call_operand.vmem [shape: f32[2,1,128], index: 2, kind: output, shape index: {}]
  %s3 = sld [smem:[#allocation0]]
  $region41: #{patch_embed.1} parent=0
    _
  %s5 = ssub.s32 1, %s3
  %s6 = scalar_select 0, %s5, %s3
  loop: start=0, step=1, limit=4
  $region2: #{patch_embed.1} parent=0 // loop_pre_header
    _
  $region3: #{patch_embed.1} parent=0 // loop_header
    %s8 = sphi 0, %s12
    %p9 = scmp.ge.s32.totalorder %s8, 4
    %s15 = sphi 0, %s27
    %s16 = sphi 0, %s23
    %s17 = sphi 0, %s15
    %s18 = sphi 0, %s16
    %s19 = sphi 0, %s17
    %s20 = sphi 0, %s18
    %s32 = sphi 0, %s34
    %s35 = sphi 0, %s32
    %s36 = sphi 0, %s35
    %s52 = sphi 0, %s36
    %s56 = sphi 0, %s56
    %s58 = sphi 0, %s56
    %s59 = sphi 0, %s58
    %s73 = sphi 0, %s59
    %s81 = sphi 0, %s83
    %s84 = sphi 0, %s81
    %s85 = sphi 0, %s84
    %s101 = sphi 0, %s85
  $region4: #{patch_embed.1} parent=0 // loop_header_branch
    %11 = sbr.rel (%p9) target = $region8
  $region5: #{patch_embed.1} parent=0 // loop_body
    %s13 = ssub.s32 %s8, 1
    %s14 = ssub.s32 %s8, 2
    %s21 = sadd.s32 1, %s16
    %p22 = scmp.ge.s32.totalorder %s21, 1
    %s23 = scalar_select %p22, 0, %s21
    %s24 = sadd.s32 1, %s15
    %s25 = scalar_select %p22, %s24, %s15
    %p26 = scmp.ge.s32.totalorder %s25, 2
    %s27 = scalar_select %p26, 0, %s25
    %s28 = ssub.s32 %s15, %s27
    %s29 = ssub.s32 %s16, %s23
    %s30 = sor.u32 %s28, %s29
    %p31 = scmp.eq.s32.totalorder %s30, 0
    %s33 = sadd.s32 %s32, 1
    %s34 = scalar_select %p31, %s32, %s33
    %p37 = pneg %p31
    %p38 = scmp.eq.s32.totalorder %s8, 1
    %p39 = por %p37, %p38
    %p40 = scmp.ne.s32.totalorder %s32, %s35
    %p41 = scmp.eq.s32.totalorder %s8, 0
    %p42 = por %p40, %p41
    %p43 = scmp.ne.s32.totalorder %s32, %s35
    %p44 = scmp.eq.s32.totalorder %s13, 1
    %p45 = por %p43, %p44
    %p46 = scmp.ne.s32.totalorder %s35, %s36
    %p47 = scmp.eq.s32.totalorder %s13, 0
    %p48 = por %p46, %p47
    %p49 = scmp.ne.s32.totalorder %s35, %s36
    %p50 = scmp.eq.s32.totalorder %s14, 1
    %p51 = por %p49, %p50
    %p53 = scmp.ne.s32.totalorder %s36, %s52
    %p54 = scmp.eq.s32.totalorder %s14, 0
    %p55 = por %p53, %p54
    %s57 = sadd.s32 %s56, 1
    %p60 = scmp.eq.s32.totalorder %s8, 1
    %p61 = scmp.ne.s32.totalorder %s56, %s58
    %p62 = scmp.eq.s32.totalorder %s8, 0
    %p63 = por %p61, %p62
    %p64 = scmp.ne.s32.totalorder %s56, %s58
    %p65 = scmp.eq.s32.totalorder %s13, 1
    %p66 = por %p64, %p65
    %p67 = scmp.ne.s32.totalorder %s58, %s59
    %p68 = scmp.eq.s32.totalorder %s13, 0
    %p69 = por %p67, %p68
    %p70 = scmp.ne.s32.totalorder %s58, %s59
    %p71 = scmp.eq.s32.totalorder %s14, 1
    %p72 = por %p70, %p71
    %p74 = scmp.ne.s32.totalorder %s59, %s73
    %p75 = scmp.eq.s32.totalorder %s14, 0
    %p76 = por %p74, %p75
    %s77 = ssub.s32 %s15, %s27
    %s78 = ssub.s32 %s16, %s23
    %s79 = sor.u32 %s77, %s78
    %p80 = scmp.eq.s32.totalorder %s79, 0
    %s82 = sadd.s32 %s81, 1
    %s83 = scalar_select %p80, %s81, %s82
    %p86 = pneg %p80
    %p87 = scmp.eq.s32.totalorder %s8, 1
    %p88 = por %p86, %p87
    %p89 = scmp.ne.s32.totalorder %s81, %s84
    %p90 = scmp.eq.s32.totalorder %s8, 0
    %p91 = por %p89, %p90
    %p92 = scmp.ne.s32.totalorder %s81, %s84
    %p93 = scmp.eq.s32.totalorder %s13, 1
    %p94 = por %p92, %p93
    %p95 = scmp.ne.s32.totalorder %s84, %s85
    %p96 = scmp.eq.s32.totalorder %s13, 0
    %p97 = por %p95, %p96
    %p98 = scmp.ne.s32.totalorder %s84, %s85
    %p99 = scmp.eq.s32.totalorder %s14, 1
    %p100 = por %p98, %p99
    %p102 = scmp.ne.s32.totalorder %s85, %s101
    %p103 = scmp.eq.s32.totalorder %s14, 0
    %p104 = por %p102, %p103
    %p105 = scmp.le.s32.totalorder 1, %s8
    %p106 = scmp.lt.s32.totalorder %s8, 3
    %p107 = pnand %p105, %p106
    %p108 = pneg %p107
    // Predicated region
    $region9: #{patch_embed.1} parent=5 // pred_check
      _
    $region10: #{patch_embed.1} parent=5 // pred_check_branch
      %110 = sbr.rel (%p107) target = $region12
    $region11: #{patch_embed.1} parent=5 // pred_region
      %s111 = ssub.s32 %s8, 1
      // Predicated region
      $region13: #{patch_embed.1} parent=11 // pred_check
        %p112 = pneg %p69
      $region14: #{patch_embed.1} parent=11 // pred_check_branch
        %114 = sbr.rel (%p112) target = $region16
      $region15: #{patch_embed.1} parent=11 // pred_region
        _
      $region16: #{patch_embed.1} parent=11 // pred_fallthru
        _
    $region12: #{patch_embed.1} parent=5 // pred_fallthru
      _
    %p115 = scmp.lt.s32.totalorder %s8, 2
    // Predicated region
    $region17: #{patch_embed.1} parent=5 // pred_check
      %p116 = pneg %p115
    $region18: #{patch_embed.1} parent=5 // pred_check_branch
      %118 = sbr.rel (%p116) target = $region20
    $region19: #{patch_embed.1} parent=5 // pred_region
      // Predicated region
      $region21: #{patch_embed.1} parent=19 // pred_check
        %p119 = pneg %p42
      $region22: #{patch_embed.1} parent=19 // pred_check_branch
        %121 = sbr.rel (%p119) target = $region24
      $region23: #{patch_embed.1} parent=19 // pred_region
        %p122 = scmp.lt.s32.totalorder %s15, 1
        %s123 = scalar_select %p122, %s15, 1
        %p124 = scmp.lt.s32.totalorder %s16, 0
        %s125 = scalar_select %p124, %s16, 0
        %s126 = smul.addr %s123, 4
        %s127 = sadd.s32 %s125, %s126
        %s128 = scalar_lea.vmem %s0, %s127
      $region24: #{patch_embed.1} parent=19 // pred_fallthru
        _
    $region20: #{patch_embed.1} parent=5 // pred_fallthru
      _
    %p129 = scmp.le.s32.totalorder 1, %s8
    %p130 = scmp.lt.s32.totalorder %s8, 3
    %p131 = pnand %p129, %p130
    %p132 = pneg %p131
    // Predicated region
    $region25: #{patch_embed.1} parent=5 // pred_check
      _
    $region26: #{patch_embed.1} parent=5 // pred_check_branch
      %134 = sbr.rel (%p131) target = $region28
    $region27: #{patch_embed.1} parent=5 // pred_region
      %s135 = ssub.s32 %s8, 1
      %p136 = scmp.lt.s32.totalorder %s17, 1
      %s137 = scalar_select %p136, %s17, 1
      %p138 = scmp.lt.s32.totalorder %s18, 0
      %s139 = scalar_select %p138, %s18, 0
      %s140 = smul.addr %s137, 4
      %s141 = sadd.s32 %s139, %s140
      %s142 = scalar_lea.vmem %s0, %s141
      %p143 = pneg %p48
      %p144 = pneg %p45
      %p145 = pneg %p69
      %p146 = pneg %p66
      %p147 = pneg %p97
      %p148 = pneg %p94
      %p149 = scmp.lt.s32.totalorder %s17, 1
      %s150 = scalar_select %p149, %s17, 1
      %p151 = scmp.lt.s32.totalorder %s18, 0
      %s152 = scalar_select %p151, %s18, 0
      %s153 = sadd.s32 %s152, %s150
      %s154 = scalar_lea.vmem %s2, %s153
      %p155 = scmp.lt.s32.totalorder %s17, 1
      %s156 = scalar_select %p155, %s17, 1
      %p157 = scmp.lt.s32.totalorder %s18, 0
      %s158 = scalar_select %p157, %s18, 0
      %s159 = smul.addr %s156, 4
      %s160 = sadd.s32 %s158, %s159
      %s161 = scalar_lea.vmem %s0, %s160
      %p162 = scmp.lt.s32.totalorder %s17, 1
      %s163 = scalar_select %p162, %s17, 1
      %p164 = scmp.lt.s32.totalorder %s18, 0
      %s165 = scalar_select %p164, %s18, 0
      %s166 = sadd.s32 %s165, %s163
      %s167 = scalar_lea.vmem %s2, %s166
      %v168 = vld [vmem:[%s161] sm:$0x1]
      %v169 = vld [vmem:[%s1] sm:$0xff]
      %v170 = vld [vmem:[%s1 + $0x8] sm:$0xff]
      %s171 = scalar_lea.vmem %s161, 1
      %v172 = vld [vmem:[%s171] sm:$0x1]
      %s173 = scalar_lea.vmem %s1, 16
      %v174 = vld [vmem:[%s173] sm:$0xff]
      %v175 = vld [vmem:[%s173 + $0x8] sm:$0xff]
      %vm176 = vcmask 130048
      %v178 = vsel %vm176, %v172, 0
      %180 = vmatprep.subr.mxu0 0.0
      %181 = vmatpush1.msra.mxu0 %v174
      %182 = vmatprep.subr.mxu0 0.0
      %183 = vmatpush1.msra.mxu0 %v175
      %184 = vmatprep.subr.mxu0 0.0
      %185 = vmatpush1.msra.mxu0 0.0
      %186 = vmatprep.subr.mxu0 0.0
      %187 = vmatpush1.msra.mxu0 0.0
      %188 = vmatprep.subr.mxu0 0.0
      %189 = vmatpush1.msra.mxu0 0.0
      %190 = vmatprep.subr.mxu0 0.0
      %191 = vmatpush1.msra.mxu0 0.0
      %192 = vmatprep.subr.mxu0 0.0
      %193 = vmatpush1.msra.mxu0 0.0
      %194 = vmatprep.subr.mxu0 0.0
      %195 = vmatpush1.msra.mxu0 0.0
      %196 = vmatprep.subr.mxu0 0.0
      %197 = vmatpush1.msra.mxu0 0.0
      %198 = vmatprep.subr.mxu0 0.0
      %199 = vmatpush1.msra.mxu0 0.0
      %200 = vmatprep.subr.mxu0 0.0
      %201 = vmatpush1.msra.mxu0 0.0
      %202 = vmatprep.subr.mxu0 0.0
      %203 = vmatpush1.msra.mxu0 0.0
      %204 = vmatprep.subr.mxu0 0.0
      %205 = vmatpush1.msra.mxu0 0.0
      %206 = vmatprep.subr.mxu0 0.0
      %207 = vmatpush1.msra.mxu0 0.0
      %208 = vmatprep.subr.mxu0 0.0
      %209 = vmatpush1.msra.mxu0 0.0
      %210 = vmatprep.subr.mxu0 0.0
      %211 = vmatpush1.msra.mxu0 0.0
      %212 = vmatprep.subr.mxu0 0.0
      %213 = vmatpush1.msra.mxu0 0.0
      %214 = vmatprep.subr.mxu0 0.0
      %215 = vmatpush1.msra.mxu0 0.0
      %216 = vmatprep.subr.mxu0 0.0
      %217 = vmatpush1.msra.mxu0 0.0
      %218 = vmatprep.subr.mxu0 0.0
      %219 = vmatpush1.msra.mxu0 0.0
      %220 = vmatprep.subr.mxu0 0.0
      %221 = vmatpush1.msra.mxu0 0.0
      %222 = vmatprep.subr.mxu0 0.0
      %223 = vmatpush1.msra.mxu0 0.0
      %224 = vmatprep.subr.mxu0 0.0
      %225 = vmatpush1.msra.mxu0 0.0
      %226 = vmatprep.subr.mxu0 0.0
      %227 = vmatpush1.msra.mxu0 0.0
      %228 = vmatprep.subr.mxu0 0.0
      %229 = vmatpush1.msra.mxu0 0.0
      %230 = vmatprep.subr.mxu0 0.0
      %231 = vmatpush1.msra.mxu0 0.0
      %232 = vmatprep.subr.mxu0 0.0
      %233 = vmatpush1.msra.mxu0 0.0
      %234 = vmatprep.subr.mxu0 0.0
      %235 = vmatpush1.msra.mxu0 0.0
      %236 = vmatprep.subr.mxu0 0.0
      %237 = vmatpush1.msra.mxu0 0.0
      %238 = vmatprep.subr.mxu0 0.0
      %239 = vmatpush1.msra.mxu0 0.0
      %240 = vmatprep.subr.mxu0 0.0
      %241 = vmatpush1.msra.mxu0 0.0
      %242 = vmatprep.subr.mxu0 0.0
      %243 = vmatpush1.msra.mxu0 0.0
      %244 = vmatprep.mubr.f32.mxu0 0.0
      %245 = vmatmul.mubr.f32.gmra.mrb[0].mxu0 %v178
      %v246 = vpop.f32.mrb[0].mxu0
      %v247 = vadd.f32 0.0, %v246
      %v248 = vpop.f32.mrb[0].mxu0
      %249 = vdwg.mxu0
      %v251 = vsel %vm176, %v168, 0
      %253 = vmatprep.subr.mxu0 0.0
      %254 = vmatpush1.msra.mxu0 %v169
      %255 = vmatprep.subr.mxu0 0.0
      %256 = vmatpush1.msra.mxu0 %v170
      %257 = vmatprep.subr.mxu0 0.0
      %258 = vmatpush1.msra.mxu0 0.0
      %259 = vmatprep.subr.mxu0 0.0
      %260 = vmatpush1.msra.mxu0 0.0
      %261 = vmatprep.subr.mxu0 0.0
      %262 = vmatpush1.msra.mxu0 0.0
      %263 = vmatprep.subr.mxu0 0.0
      %264 = vmatpush1.msra.mxu0 0.0
      %265 = vmatprep.subr.mxu0 0.0
      %266 = vmatpush1.msra.mxu0 0.0
      %267 = vmatprep.subr.mxu0 0.0
      %268 = vmatpush1.msra.mxu0 0.0
      %269 = vmatprep.subr.mxu0 0.0
      %270 = vmatpush1.msra.mxu0 0.0
      %271 = vmatprep.subr.mxu0 0.0
      %272 = vmatpush1.msra.mxu0 0.0
      %273 = vmatprep.subr.mxu0 0.0
      %274 = vmatpush1.msra.mxu0 0.0
      %275 = vmatprep.subr.mxu0 0.0
      %276 = vmatpush1.msra.mxu0 0.0
      %277 = vmatprep.subr.mxu0 0.0
      %278 = vmatpush1.msra.mxu0 0.0
      %279 = vmatprep.subr.mxu0 0.0
      %280 = vmatpush1.msra.mxu0 0.0
      %281 = vmatprep.subr.mxu0 0.0
      %282 = vmatpush1.msra.mxu0 0.0
      %283 = vmatprep.subr.mxu0 0.0
      %284 = vmatpush1.msra.mxu0 0.0
      %285 = vmatprep.subr.mxu0 0.0
      %286 = vmatpush1.msra.mxu0 0.0
      %287 = vmatprep.subr.mxu0 0.0
      %288 = vmatpush1.msra.mxu0 0.0
      %289 = vmatprep.subr.mxu0 0.0
      %290 = vmatpush1.msra.mxu0 0.0
      %291 = vmatprep.subr.mxu0 0.0
      %292 = vmatpush1.msra.mxu0 0.0
      %293 = vmatprep.subr.mxu0 0.0
      %294 = vmatpush1.msra.mxu0 0.0
      %295 = vmatprep.subr.mxu0 0.0
      %296 = vmatpush1.msra.mxu0 0.0
      %297 = vmatprep.subr.mxu0 0.0
      %298 = vmatpush1.msra.mxu0 0.0
      %299 = vmatprep.subr.mxu0 0.0
      %300 = vmatpush1.msra.mxu0 0.0
      %301 = vmatprep.subr.mxu0 0.0
      %302 = vmatpush1.msra.mxu0 0.0
      %303 = vmatprep.subr.mxu0 0.0
      %304 = vmatpush1.msra.mxu0 0.0
      %305 = vmatprep.subr.mxu0 0.0
      %306 = vmatpush1.msra.mxu0 0.0
      %307 = vmatprep.subr.mxu0 0.0
      %308 = vmatpush1.msra.mxu0 0.0
      %309 = vmatprep.subr.mxu0 0.0
      %310 = vmatpush1.msra.mxu0 0.0
      %311 = vmatprep.subr.mxu0 0.0
      %312 = vmatpush1.msra.mxu0 0.0
      %313 = vmatprep.subr.mxu0 0.0
      %314 = vmatpush1.msra.mxu0 0.0
      %315 = vmatprep.subr.mxu0 0.0
      %316 = vmatpush1.msra.mxu0 0.0
      %317 = vmatprep.mubr.f32.mxu0 0.0
      %318 = vmatmul.mubr.f32.gmra.mrb[0].mxu0 %v251
      %v319 = vpop.f32.mrb[0].mxu0
      %v320 = vadd.f32 %v247, %v319
      %v321 = vpop.f32.mrb[0].mxu0
      %322 = vdwg.mxu0
      %s323 = scalar_lea.vmem %s161, 2
      %v324 = vld [vmem:[%s323] sm:$0x1]
      %s325 = scalar_lea.vmem %s1, 32
      %v326 = vld [vmem:[%s325] sm:$0xff]
      %v327 = vld [vmem:[%s325 + $0x8] sm:$0xff]
      %v329 = vsel %vm176, %v324, 0
      %331 = vmatprep.subr.mxu0 0.0
      %332 = vmatpush1.msra.mxu0 %v326
      %333 = vmatprep.subr.mxu0 0.0
      %334 = vmatpush1.msra.mxu0 %v327
      %335 = vmatprep.subr.mxu0 0.0
      %336 = vmatpush1.msra.mxu0 0.0
      %337 = vmatprep.subr.mxu0 0.0
      %338 = vmatpush1.msra.mxu0 0.0
      %339 = vmatprep.subr.mxu0 0.0
      %340 = vmatpush1.msra.mxu0 0.0
      %341 = vmatprep.subr.mxu0 0.0
      %342 = vmatpush1.msra.mxu0 0.0
      %343 = vmatprep.subr.mxu0 0.0
      %344 = vmatpush1.msra.mxu0 0.0
      %345 = vmatprep.subr.mxu0 0.0
      %346 = vmatpush1.msra.mxu0 0.0
      %347 = vmatprep.subr.mxu0 0.0
      %348 = vmatpush1.msra.mxu0 0.0
      %349 = vmatprep.subr.mxu0 0.0
      %350 = vmatpush1.msra.mxu0 0.0
      %351 = vmatprep.subr.mxu0 0.0
      %352 = vmatpush1.msra.mxu0 0.0
      %353 = vmatprep.subr.mxu0 0.0
      %354 = vmatpush1.msra.mxu0 0.0
      %355 = vmatprep.subr.mxu0 0.0
      %356 = vmatpush1.msra.mxu0 0.0
      %357 = vmatprep.subr.mxu0 0.0
      %358 = vmatpush1.msra.mxu0 0.0
      %359 = vmatprep.subr.mxu0 0.0
      %360 = vmatpush1.msra.mxu0 0.0
      %361 = vmatprep.subr.mxu0 0.0
      %362 = vmatpush1.msra.mxu0 0.0
      %363 = vmatprep.subr.mxu0 0.0
      %364 = vmatpush1.msra.mxu0 0.0
      %365 = vmatprep.subr.mxu0 0.0
      %366 = vmatpush1.msra.mxu0 0.0
      %367 = vmatprep.subr.mxu0 0.0
      %368 = vmatpush1.msra.mxu0 0.0
      %369 = vmatprep.subr.mxu0 0.0
      %370 = vmatpush1.msra.mxu0 0.0
      %371 = vmatprep.subr.mxu0 0.0
      %372 = vmatpush1.msra.mxu0 0.0
      %373 = vmatprep.subr.mxu0 0.0
      %374 = vmatpush1.msra.mxu0 0.0
      %375 = vmatprep.subr.mxu0 0.0
      %376 = vmatpush1.msra.mxu0 0.0
      %377 = vmatprep.subr.mxu0 0.0
      %378 = vmatpush1.msra.mxu0 0.0
      %379 = vmatprep.subr.mxu0 0.0
      %380 = vmatpush1.msra.mxu0 0.0
      %381 = vmatprep.subr.mxu0 0.0
      %382 = vmatpush1.msra.mxu0 0.0
      %383 = vmatprep.subr.mxu0 0.0
      %384 = vmatpush1.msra.mxu0 0.0
      %385 = vmatprep.subr.mxu0 0.0
      %386 = vmatpush1.msra.mxu0 0.0
      %387 = vmatprep.subr.mxu0 0.0
      %388 = vmatpush1.msra.mxu0 0.0
      %389 = vmatprep.subr.mxu0 0.0
      %390 = vmatpush1.msra.mxu0 0.0
      %391 = vmatprep.subr.mxu0 0.0
      %392 = vmatpush1.msra.mxu0 0.0
      %393 = vmatprep.subr.mxu0 0.0
      %394 = vmatpush1.msra.mxu0 0.0
      %395 = vmatprep.mubr.f32.mxu0 0.0
      %396 = vmatmul.mubr.f32.gmra.mrb[0].mxu0 %v329
      %v397 = vpop.f32.mrb[0].mxu0
      %v398 = vadd.f32 0.0, %v397
      %v399 = vpop.f32.mrb[0].mxu0
      %400 = vdwg.mxu0
      %v401 = vadd.f32 %v320, %v398
      %s402 = scalar_lea.vmem %s161, 3
      %v403 = vld [vmem:[%s402] sm:$0x1]
      %s404 = scalar_lea.vmem %s1, 48
      %v405 = vld [vmem:[%s404] sm:$0xff]
      %v406 = vld [vmem:[%s404 + $0x8] sm:$0xff]
      %v408 = vsel %vm176, %v403, 0
      %410 = vmatprep.subr.mxu0 0.0
      %411 = vmatpush1.msra.mxu0 %v405
      %412 = vmatprep.subr.mxu0 0.0
      %413 = vmatpush1.msra.mxu0 %v406
      %414 = vmatprep.subr.mxu0 0.0
      %415 = vmatpush1.msra.mxu0 0.0
      %416 = vmatprep.subr.mxu0 0.0
      %417 = vmatpush1.msra.mxu0 0.0
      %418 = vmatprep.subr.mxu0 0.0
      %419 = vmatpush1.msra.mxu0 0.0
      %420 = vmatprep.subr.mxu0 0.0
      %421 = vmatpush1.msra.mxu0 0.0
      %422 = vmatprep.subr.mxu0 0.0
      %423 = vmatpush1.msra.mxu0 0.0
      %424 = vmatprep.subr.mxu0 0.0
      %425 = vmatpush1.msra.mxu0 0.0
      %426 = vmatprep.subr.mxu0 0.0
      %427 = vmatpush1.msra.mxu0 0.0
      %428 = vmatprep.subr.mxu0 0.0
      %429 = vmatpush1.msra.mxu0 0.0
      %430 = vmatprep.subr.mxu0 0.0
      %431 = vmatpush1.msra.mxu0 0.0
      %432 = vmatprep.subr.mxu0 0.0
      %433 = vmatpush1.msra.mxu0 0.0
      %434 = vmatprep.subr.mxu0 0.0
      %435 = vmatpush1.msra.mxu0 0.0
      %436 = vmatprep.subr.mxu0 0.0
      %437 = vmatpush1.msra.mxu0 0.0
      %438 = vmatprep.subr.mxu0 0.0
      %439 = vmatpush1.msra.mxu0 0.0
      %440 = vmatprep.subr.mxu0 0.0
      %441 = vmatpush1.msra.mxu0 0.0
      %442 = vmatprep.subr.mxu0 0.0
      %443 = vmatpush1.msra.mxu0 0.0
      %444 = vmatprep.subr.mxu0 0.0
      %445 = vmatpush1.msra.mxu0 0.0
      %446 = vmatprep.subr.mxu0 0.0
      %447 = vmatpush1.msra.mxu0 0.0
      %448 = vmatprep.subr.mxu0 0.0
      %449 = vmatpush1.msra.mxu0 0.0
      %450 = vmatprep.subr.mxu0 0.0
      %451 = vmatpush1.msra.mxu0 0.0
      %452 = vmatprep.subr.mxu0 0.0
      %453 = vmatpush1.msra.mxu0 0.0
      %454 = vmatprep.subr.mxu0 0.0
      %455 = vmatpush1.msra.mxu0 0.0
      %456 = vmatprep.subr.mxu0 0.0
      %457 = vmatpush1.msra.mxu0 0.0
      %458 = vmatprep.subr.mxu0 0.0
      %459 = vmatpush1.msra.mxu0 0.0
      %460 = vmatprep.subr.mxu0 0.0
      %461 = vmatpush1.msra.mxu0 0.0
      %462 = vmatprep.subr.mxu0 0.0
      %463 = vmatpush1.msra.mxu0 0.0
      %464 = vmatprep.subr.mxu0 0.0
      %465 = vmatpush1.msra.mxu0 0.0
      %466 = vmatprep.subr.mxu0 0.0
      %467 = vmatpush1.msra.mxu0 0.0
      %468 = vmatprep.subr.mxu0 0.0
      %469 = vmatpush1.msra.mxu0 0.0
      %470 = vmatprep.subr.mxu0 0.0
      %471 = vmatpush1.msra.mxu0 0.0
      %472 = vmatprep.subr.mxu0 0.0
      %473 = vmatpush1.msra.mxu0 0.0
      %474 = vmatprep.mubr.f32.mxu0 0.0
      %475 = vmatmul.mubr.f32.gmra.mrb[0].mxu0 %v408
      %v476 = vpop.f32.mrb[0].mxu0
      %v477 = vadd.f32 0.0, %v476
      %v478 = vpop.f32.mrb[0].mxu0
      %479 = vdwg.mxu0
      %v480 = vadd.f32 %v401, %v477
      %481 = vst [vmem:[%s167] sm:$0x1] %v480
      %p482 = scmp.lt.s32.totalorder %s17, 1
      %s483 = scalar_select %p482, %s17, 1
      %p484 = scmp.lt.s32.totalorder %s18, 0
      %s485 = scalar_select %p484, %s18, 0
      %s486 = sadd.s32 %s485, %s483
      %s487 = scalar_lea.vmem %s2, %s486
      // Predicated region
      $region29: #{patch_embed.1} parent=27 // pred_check
        %p488 = pneg %p94
      $region30: #{patch_embed.1} parent=27 // pred_check_branch
        %490 = sbr.rel (%p488) target = $region32
      $region31: #{patch_embed.1} parent=27 // pred_region
        _
      $region32: #{patch_embed.1} parent=27 // pred_fallthru
        _
    $region28: #{patch_embed.1} parent=5 // pred_fallthru
      _
    %p491 = scmp.le.s32.totalorder 2, %s8
    // Predicated region
    $region33: #{patch_embed.1} parent=5 // pred_check
      %p492 = pneg %p491
    $region34: #{patch_embed.1} parent=5 // pred_check_branch
      %494 = sbr.rel (%p492) target = $region36
    $region35: #{patch_embed.1} parent=5 // pred_region
      %s495 = ssub.s32 %s8, 2
      // Predicated region
      $region37: #{patch_embed.1} parent=35 // pred_check
        %p496 = pneg %p100
      $region38: #{patch_embed.1} parent=35 // pred_check_branch
        %498 = sbr.rel (%p496) target = $region40
      $region39: #{patch_embed.1} parent=35 // pred_region
        %p499 = scmp.lt.s32.totalorder %s19, 1
        %s500 = scalar_select %p499, %s19, 1
        %p501 = scmp.lt.s32.totalorder %s20, 0
        %s502 = scalar_select %p501, %s20, 0
        %s503 = sadd.s32 %s502, %s500
        %s504 = scalar_lea.vmem %s2, %s503
      $region40: #{patch_embed.1} parent=35 // pred_fallthru
        _
    $region36: #{patch_embed.1} parent=5 // pred_fallthru
      _
  $region6: #{patch_embed.1} parent=0 // loop_footer
    %s12 = sadd.s32 1, %s8
  $region7: #{patch_embed.1} parent=0 // loop_footer_branch
    %7 = sbr.rel target = $region3
  $region8: #{patch_embed.1} parent=0 // loop_exit
    _

</llo_original>
